<compile_context>
chip_gen: v7x
topology: tpu7x:2x2x1
jax: 0.10.0
libtpu: 0.0.40
codegen_flags: <defaults>
</compile_context>

<pallas_src>
import functools
import math

import jax
import jax.numpy as jnp
from jax.experimental import pallas as pl
from jax.experimental.pallas import tpu as pltpu


_LANE = 128
_TINY_TOTAL_BYTES = 1 << 20   # below this, a single full-array block is cheapest
_MIN_GRID_STEPS = 8           # keep both v7x TensorCores busy + hide DMA


def _fusion_kernel(text_ref, xreact_ref, xwant_ref, w_ref, o_ref, *, alpha):
    # Tiles in VMEM: text/xreact/xwant/out -> (TR, C), W -> (1, C) broadcast on rows.
    t = text_ref[...].astype(jnp.float32)
    r = xreact_ref[...].astype(jnp.float32)
    x = xwant_ref[...].astype(jnp.float32)
    w = w_ref[...].astype(jnp.float32)
    # z = alpha*(t + W*r) + (1-alpha)*(t + W*x) == t + W*(alpha*r + (1-alpha)*x)
    fused = t + w * (alpha * r + (1.0 - alpha) * x)
    o_ref[...] = fused.astype(o_ref.dtype)


def _vmem_capacity_bytes():
    try:
        return int(pltpu.get_tpu_info().vmem_capacity_bytes)
    except Exception:
        # Conservative fallback: assume the smallest per-TC VMEM (v7x, 64 MiB).
        return 64 * 1024 * 1024


def fushion_forward(text_emb, xreact_emb, xwant_emb, W, alpha):
    """JAX/Pallas equivalent of Fushion.forward.

    text_emb / xReact_emb / xWant_emb: identically shaped arrays (..., D)
    W: (D,) learned per-feature gate
    alpha: python float (args.weight_fuse_relation)
    """
    # TODO(synk): if alpha ever becomes a traced/learned scalar, pass it as an SMEM
    # scalar input instead of baking it in at trace time.
    orig_shape = text_emb.shape
    D = int(orig_shape[-1])
    rows = 1
    for s in orig_shape[:-1]:
        rows *= int(s)

    out_dtype = text_emb.dtype
    itemsize = jnp.dtype(out_dtype).itemsize
    sublane = max(8, 32 // itemsize)   # f32 -> 8, bf16 -> 16, int8/fp8 -> 32

    if rows == 0 or D == 0:
        return jnp.zeros(orig_shape, dtype=out_dtype)

    # ---- layout: keep the lane axis a multiple of 128 whenever possible ----------
    # For typical D (128 / 768) this is the identity. For awkward D we flatten
    # (rows, D) -> (R, C) with C = lcm(D, 128) so the output stays lane-dense and
    # the per-feature gate W (period D, which divides C) still lines up per lane.
    rows_l, lane_w = rows, D
    if D % _LANE != 0:
        C = (D * _LANE) // math.gcd(D, _LANE)   # lcm(D, 128)
        if (rows * D) % C == 0:
            rows_l, lane_w = (rows * D) // C, C

    t2 = text_emb.reshape(rows_l, lane_w)
    r2 = xreact_emb.reshape(rows_l, lane_w)
    x2 = xwant_emb.reshape(rows_l, lane_w)
    if lane_w != D:
        Wb = jnp.tile(W.reshape(D), lane_w // D).reshape(1, lane_w)
    else:
        Wb = W.reshape(1, lane_w)

    # ---- generation-aware tile sizing ---------------------------------------------
    vmem_cap = _vmem_capacity_bytes()
    if vmem_cap > 64 * 1024 * 1024:          # v5e / v6e: 128 MiB physical VMEM
        per_stream_tile_bytes = 4 * 1024 * 1024
        vmem_clamp = 48 * 1024 * 1024
    else:                                     # v7x (64 MiB physical) or unknown
        per_stream_tile_bytes = 2 * 1024 * 1024
        vmem_clamp = 32 * 1024 * 1024

    bytes_per_row = lane_w * itemsize
    total_stream_bytes = 4 * rows * D * itemsize      # 3 inputs + 1 output

    if total_stream_bytes <= _TINY_TOTAL_BYTES or rows_l <= sublane:
        # Genuinely tiny: one full-array block, single grid step, no pipeline.
        row_tile = rows_l
    else:
        tile_by_bytes = per_stream_tile_bytes // bytes_per_row
        tile_by_steps = pl.cdiv(rows_l, _MIN_GRID_STEPS)   # keep >= ~8 grid steps
        row_tile = min(tile_by_bytes, tile_by_steps)
        row_tile = max(sublane, (row_tile // sublane) * sublane)
        row_tile = min(row_tile, rows_l)

    # No padding: the ragged last block (if any) is clipped/masked by Pallas.
    grid = (pl.cdiv(rows_l, row_tile),)

    row_spec = pl.BlockSpec((row_tile, lane_w), lambda i: (i, 0))
    w_spec = pl.BlockSpec((1, lane_w), lambda i: (0, 0))

    # 2 pipeline buffers x (3 inputs + 1 output) row tiles + double-buffered W + slack.
    needed = 2 * 4 * row_tile * lane_w * itemsize + 2 * lane_w * itemsize
    vmem_limit = int(min(vmem_clamp, max(needed + 2 * 1024 * 1024, 4 * 1024 * 1024)))

    cost = pl.CostEstimate(
        flops=4 * rows * D,
        transcendentals=0,
        bytes_accessed=total_stream_bytes + D * itemsize,
    )

    out = pl.pallas_call(
        functools.partial(_fusion_kernel, alpha=float(alpha)),
        out_shape=jax.ShapeDtypeStruct((rows_l, lane_w), out_dtype),
        grid_spec=pltpu.PrefetchScalarGridSpec(
            num_scalar_prefetch=0,
            grid=grid,
            in_specs=[row_spec, row_spec, row_spec, w_spec],
            out_specs=row_spec,
        ),
        compiler_params=pltpu.CompilerParams(
            dimension_semantics=("parallel",),
            vmem_limit_bytes=vmem_limit,
        ),
        cost_estimate=cost,
    )(t2, r2, x2, Wb)

    return out.reshape(orig_shape)


def reference_forward(text_emb, xreact_emb, xwant_emb, W, alpha):
    z1 = text_emb + W * xreact_emb
    z2 = text_emb + W * xwant_emb
    return alpha * z1 + (1.0 - alpha) * z2


if __name__ == "__main__":
    alpha = 0.7  # args.weight_fuse_relation

    key = jax.random.PRNGKey(0)
    k_text, k_react, k_want, k_w = jax.random.split(key, 4)

    def run_case(shape):
        D = shape[-1]
        t = jax.random.normal(k_text, shape, dtype=jnp.float32)
        r = jax.random.normal(k_react, shape, dtype=jnp.float32)
        x = jax.random.normal(k_want, shape, dtype=jnp.float32)
        w = jax.random.normal(k_w, (D,), dtype=jnp.float32)
        out = jax.block_until_ready(fushion_forward(t, r, x, w, alpha))
        ref = reference_forward(t, r, x, w, alpha)
        assert out.shape == ref.shape and out.dtype == ref.dtype
        assert jnp.allclose(out, ref, atol=1e-5, rtol=1e-5), (
            shape, float(jnp.max(jnp.abs(out - ref))))

    # Small BERT-like shape (batch=2, seq=8, text_feat_dim=768): tiny single-block path.
    run_case((2, 8, 768))
    # Larger, tile-non-divisible row count: exercises the masked partial last block.
    run_case((3000, 128))
    # Awkward feature dim (not a multiple of 128): exercises the lane-dense repack.
    run_case((2, 8, 96))
    # Awkward feature dim where the lane-dense repack does not divide evenly (fallback).
    run_case((15, 96))

    print("KERNEL_OK")
</pallas_src>

<mosaic_0001>
module attributes {stable_mosaic.version = 11 : i64} {
  func.func @_fusion_kernel(%arg0: i32, %arg1: memref<16x768xf32, #tpu.memory_space<vmem>>, %arg2: memref<16x768xf32, #tpu.memory_space<vmem>>, %arg3: memref<16x768xf32, #tpu.memory_space<vmem>>, %arg4: memref<1x768xf32, #tpu.memory_space<vmem>>, %arg5: memref<16x768xf32, #tpu.memory_space<vmem>>) attributes {dimension_semantics = [#tpu.dimension_semantics<parallel>], iteration_bounds = array<i64: 1>, scalar_prefetch = 0 : i64, scratch_operands = 0 : i64, tpu.core_type = #tpu.core_type<tc>, window_params = [{transform_indices = @transform_0, window_bounds = array<i64: 16, 768>}, {transform_indices = @transform_1, window_bounds = array<i64: 16, 768>}, {transform_indices = @transform_2, window_bounds = array<i64: 16, 768>}, {pipeline_mode = #tpu.pipeline_mode<synchronous>, transform_indices = @transform_3, window_bounds = array<i64: 1, 768>}, {transform_indices = @transform_4, window_bounds = array<i64: 16, 768>}]} {
    %c0 = arith.constant 0 : index
    %c0_0 = arith.constant 0 : index
    %0 = vector.load %arg1[%c0, %c0_0] : memref<16x768xf32, #tpu.memory_space<vmem>>, vector<16x768xf32>
    %c0_1 = arith.constant 0 : index
    %c0_2 = arith.constant 0 : index
    %1 = vector.load %arg2[%c0_1, %c0_2] : memref<16x768xf32, #tpu.memory_space<vmem>>, vector<16x768xf32>
    %c0_3 = arith.constant 0 : index
    %c0_4 = arith.constant 0 : index
    %2 = vector.load %arg3[%c0_3, %c0_4] : memref<16x768xf32, #tpu.memory_space<vmem>>, vector<16x768xf32>
    %c0_5 = arith.constant 0 : index
    %c0_6 = arith.constant 0 : index
    %3 = vector.load %arg4[%c0_5, %c0_6] : memref<1x768xf32, #tpu.memory_space<vmem>>, vector<1x768xf32>
    %cst = arith.constant 0.699999988 : f32
    %4 = vector.broadcast %cst : f32 to vector<16x768xf32>
    %5 = arith.mulf %4, %1 : vector<16x768xf32>
    %cst_7 = arith.constant 3.000000e-01 : f32
    %6 = vector.broadcast %cst_7 : f32 to vector<16x768xf32>
    %7 = arith.mulf %6, %2 : vector<16x768xf32>
    %8 = arith.addf %5, %7 : vector<16x768xf32>
    %9 = vector.broadcast %3 : vector<1x768xf32> to vector<16x768xf32>
    %10 = arith.mulf %9, %8 : vector<16x768xf32>
    %11 = arith.addf %0, %10 : vector<16x768xf32>
    %c0_8 = arith.constant 0 : index
    %c0_9 = arith.constant 0 : index
    %12 = vector.load %arg5[%c0_8, %c0_9] : memref<16x768xf32, #tpu.memory_space<vmem>>, vector<16x768xf32>
    tpu.vector_store %arg5[%c0_8, %c0_9], %11 {strides = array<i32>} : memref<16x768xf32, #tpu.memory_space<vmem>>, vector<16x768xf32>,
    return
  }
  func.func @transform_0(%arg0: i32) -> (i32, i32) {
    %c0_i32 = arith.constant 0 : i32
    %c0_i32_0 = arith.constant 0 : i32
    return %arg0, %c0_i32 : i32, i32
  }
  func.func @transform_1(%arg0: i32) -> (i32, i32) {
    %c0_i32 = arith.constant 0 : i32
    %c0_i32_0 = arith.constant 0 : i32
    return %arg0, %c0_i32 : i32, i32
  }
  func.func @transform_2(%arg0: i32) -> (i32, i32) {
    %c0_i32 = arith.constant 0 : i32
    %c0_i32_0 = arith.constant 0 : i32
    return %arg0, %c0_i32 : i32, i32
  }
  func.func @transform_3(%arg0: i32) -> (i32, i32) {
    %c0_i32 = arith.constant 0 : i32
    %c0_i32_0 = arith.constant 0 : i32
    %c0_i32_1 = arith.constant 0 : i32
    return %c0_i32, %c0_i32_0 : i32, i32
  }
  func.func @transform_4(%arg0: i32) -> (i32, i32) {
    %c0_i32 = arith.constant 0 : i32
    %c0_i32_0 = arith.constant 0 : i32
    return %arg0, %c0_i32 : i32, i32
  }
}

</mosaic_0001>

<llo_original>
// kernel: tpu_custom_call.1
$region0: #{tpu_custom_call.1}
  #allocation0 [shape = 'u32[]', space=smem, size = 0x4, offset = 0x4, fixed_abs, tag = 'smem constant byte address 0x4 - core index']
  #allocation1 [shape = 'u32[144,128]{1,0:T(1,128)}', space=vmem, size = 0x12000, scoped, tag = 'internal scratch']
  %s0 = inlined_call_operand.hbm [shape: f32[16,768], index: 0, kind: input, shape index: {}]
  %s1 = inlined_call_operand.hbm [shape: f32[16,768], index: 1, kind: input, shape index: {}]
  %s2 = inlined_call_operand.hbm [shape: f32[16,768], index: 2, kind: input, shape index: {}]
  %s3 = inlined_call_operand.vmem [shape: f32[1,768], index: 3, kind: input, shape index: {}]
  %s4 = inlined_call_operand.hbm [shape: f32[16,768], index: 4, kind: output, shape index: {}]
  %s5 = sld [smem:[#allocation0]]
  $region38: #{tpu_custom_call.1} parent=0
    _
  %s7 = ssub.s32 1, %s5
  %s8 = scalar_select 0, %s7, %s5
  $region1: #{tpu_custom_call.1} parent=0
    #allocation2 [shape = 'u8[49152]{0}', space=vmem, size = 0xc000, scoped, tag = 'input window, operand 0, single buffered']
    #allocation3 [shape = 's32[1]{0}', space=sflag, size = 0x4, scoped, tag = 'scoped memory for tpu_custom_call.1']
    #allocation4 [shape = 's32[1]{0}', space=sflag, size = 0x4, scoped, tag = 'scoped memory for tpu_custom_call.1']
    #allocation5 [shape = 'u8[49152]{0}', space=vmem, size = 0xc000, scoped, tag = 'input window, operand 1, single buffered']
    #allocation6 [shape = 's32[1]{0}', space=sflag, size = 0x4, scoped, tag = 'scoped memory for tpu_custom_call.1']
    #allocation7 [shape = 'u8[49152]{0}', space=vmem, size = 0xc000, scoped, tag = 'input window, operand 2, single buffered']
    #allocation8 [shape = 'u8[49152]{0}', space=vmem, size = 0xc000, scoped, tag = 'output window, operand 0, single buffered']
    %9 = vsyncpa [#allocation3], 0
    %10 = vsyncpa [#allocation6], 0
    %11 = vsyncpa [#allocation4], 0
    // Predicated region
    $region2: #{tpu_custom_call.1} parent=1 // pred_check
      _
    $region3: #{tpu_custom_call.1} parent=1 // pred_check_branch
      %13 = sbr.rel (0) target = $region5
    $region4: #{tpu_custom_call.1} parent=1 // pred_region
      %s15 = ssub.s32 1536, 1536
      %16 = vsyncadd [#allocation3], %s15
      %s17 = sshll.u32 [#allocation2], 4
      %s18 = int_to_ptr.vmem [resolvable:$true] %s17
      %23 = dma.hbm_to_vmem [thread:$0]  %s0, 1536, %s18, [#allocation3], 768, 768, 48
    $region5: #{tpu_custom_call.1} parent=1 // pred_fallthru
      _
    // Predicated region
    $region6: #{tpu_custom_call.1} parent=1 // pred_check
      _
    $region7: #{tpu_custom_call.1} parent=1 // pred_check_branch
      %25 = sbr.rel (0) target = $region9
    $region8: #{tpu_custom_call.1} parent=1 // pred_region
      %s27 = ssub.s32 1536, 1536
      %28 = vsyncadd [#allocation6], %s27
      %s29 = sshll.u32 [#allocation5], 4
      %s30 = int_to_ptr.vmem [resolvable:$true] %s29
      %35 = dma.hbm_to_vmem [thread:$0]  %s1, 1536, %s30, [#allocation6], 768, 768, 48
    $region9: #{tpu_custom_call.1} parent=1 // pred_fallthru
      _
    // Predicated region
    $region10: #{tpu_custom_call.1} parent=1 // pred_check
      _
    $region11: #{tpu_custom_call.1} parent=1 // pred_check_branch
      %37 = sbr.rel (0) target = $region13
    $region12: #{tpu_custom_call.1} parent=1 // pred_region
      %s39 = ssub.s32 1536, 1536
      %40 = vsyncadd [#allocation6], %s39
      %s41 = sshll.u32 [#allocation7], 4
      %s42 = int_to_ptr.vmem [resolvable:$true] %s41
      %47 = dma.hbm_to_vmem [thread:$0]  %s2, 1536, %s42, [#allocation6], 768, 768, 48
    $region13: #{tpu_custom_call.1} parent=1 // pred_fallthru
      _
    // Predicated region
    $region14: #{tpu_custom_call.1} parent=1 // pred_check
      _
    $region15: #{tpu_custom_call.1} parent=1 // pred_check_branch
      %49 = sbr.rel (0) target = $region17
    $region16: #{tpu_custom_call.1} parent=1 // pred_region
      _
    $region17: #{tpu_custom_call.1} parent=1 // pred_fallthru
      _
    // Predicated region
    $region18: #{tpu_custom_call.1} parent=1 // pred_check
      _
    $region19: #{tpu_custom_call.1} parent=1 // pred_check_branch
      %51 = sbr.rel (0) target = $region21
    $region20: #{tpu_custom_call.1} parent=1 // pred_region
      %52 = dma.done [#allocation3], 1536
    $region21: #{tpu_custom_call.1} parent=1 // pred_fallthru
      _
    // Predicated region
    $region22: #{tpu_custom_call.1} parent=1 // pred_check
      _
    $region23: #{tpu_custom_call.1} parent=1 // pred_check_branch
      %54 = sbr.rel (0) target = $region25
    $region24: #{tpu_custom_call.1} parent=1 // pred_region
      %55 = dma.done [#allocation6], 1536
    $region25: #{tpu_custom_call.1} parent=1 // pred_fallthru
      _
    // Predicated region
    $region26: #{tpu_custom_call.1} parent=1 // pred_check
      _
    $region27: #{tpu_custom_call.1} parent=1 // pred_check_branch
      %57 = sbr.rel (0) target = $region29
    $region28: #{tpu_custom_call.1} parent=1 // pred_region
      %58 = dma.done [#allocation6], 1536
    $region29: #{tpu_custom_call.1} parent=1 // pred_fallthru
      _
    %v59 = vld [vmem:[#allocation2] sm:$0xff]
    %v60 = vld [vmem:[#allocation2 + $0x8] sm:$0xff]
    %v61 = vld [vmem:[#allocation2 + $0x10] sm:$0xff]
    %v62 = vld [vmem:[#allocation2 + $0x18] sm:$0xff]
    %v63 = vld [vmem:[#allocation2 + $0x20] sm:$0xff]
    %v64 = vld [vmem:[#allocation2 + $0x28] sm:$0xff]
    %v65 = vld [vmem:[#allocation2 + $0x30] sm:$0xff]
    %v66 = vld [vmem:[#allocation2 + $0x38] sm:$0xff]
    %v67 = vld [vmem:[#allocation2 + $0x40] sm:$0xff]
    %v68 = vld [vmem:[#allocation2 + $0x48] sm:$0xff]
    %v69 = vld [vmem:[#allocation2 + $0x50] sm:$0xff]
    %v70 = vld [vmem:[#allocation2 + $0x58] sm:$0xff]
    %v71 = vld [vmem:[#allocation5] sm:$0xff]
    %v72 = vld [vmem:[#allocation5 + $0x8] sm:$0xff]
    %v73 = vld [vmem:[#allocation5 + $0x10] sm:$0xff]
    %v74 = vld [vmem:[#allocation5 + $0x18] sm:$0xff]
    %v75 = vld [vmem:[#allocation5 + $0x20] sm:$0xff]
    %v76 = vld [vmem:[#allocation5 + $0x28] sm:$0xff]
    %v77 = vld [vmem:[#allocation5 + $0x30] sm:$0xff]
    %v78 = vld [vmem:[#allocation5 + $0x38] sm:$0xff]
    %v79 = vld [vmem:[#allocation5 + $0x40] sm:$0xff]
    %v80 = vld [vmem:[#allocation5 + $0x48] sm:$0xff]
    %v81 = vld [vmem:[#allocation5 + $0x50] sm:$0xff]
    %v82 = vld [vmem:[#allocation5 + $0x58] sm:$0xff]
    %v83 = vld [vmem:[#allocation7] sm:$0xff]
    %v84 = vld [vmem:[#allocation7 + $0x8] sm:$0xff]
    %v85 = vld [vmem:[#allocation7 + $0x10] sm:$0xff]
    %v86 = vld [vmem:[#allocation7 + $0x18] sm:$0xff]
    %v87 = vld [vmem:[#allocation7 + $0x20] sm:$0xff]
    %v88 = vld [vmem:[#allocation7 + $0x28] sm:$0xff]
    %v89 = vld [vmem:[#allocation7 + $0x30] sm:$0xff]
    %v90 = vld [vmem:[#allocation7 + $0x38] sm:$0xff]
    %v91 = vld [vmem:[#allocation7 + $0x40] sm:$0xff]
    %v92 = vld [vmem:[#allocation7 + $0x48] sm:$0xff]
    %v93 = vld [vmem:[#allocation7 + $0x50] sm:$0xff]
    %v94 = vld [vmem:[#allocation7 + $0x58] sm:$0xff]
    %v95 = vld [vmem:[%s3] sm:$0x3f]
    %v96 = vmul.f32 %v71, 0.7
    %v97 = vmul.f32 %v72, 0.7
    %v98 = vmul.f32 %v73, 0.7
    %v99 = vmul.f32 %v74, 0.7
    %v100 = vmul.f32 %v75, 0.7
    %v101 = vmul.f32 %v76, 0.7
    %v102 = vmul.f32 %v77, 0.7
    %v103 = vmul.f32 %v78, 0.7
    %v104 = vmul.f32 %v79, 0.7
    %v105 = vmul.f32 %v80, 0.7
    %v106 = vmul.f32 %v81, 0.7
    %v107 = vmul.f32 %v82, 0.7
    %v108 = vmul.f32 %v83, 0.3
    %v109 = vmul.f32 %v84, 0.3
    %v110 = vmul.f32 %v85, 0.3
    %v111 = vmul.f32 %v86, 0.3
    %v112 = vmul.f32 %v87, 0.3
    %v113 = vmul.f32 %v88, 0.3
    %v114 = vmul.f32 %v89, 0.3
    %v115 = vmul.f32 %v90, 0.3
    %v116 = vmul.f32 %v91, 0.3
    %v117 = vmul.f32 %v92, 0.3
    %v118 = vmul.f32 %v93, 0.3
    %v119 = vmul.f32 %v94, 0.3
    %v120 = vadd.f32 %v96, %v108
    %v121 = vadd.f32 %v97, %v109
    %v122 = vadd.f32 %v98, %v110
    %v123 = vadd.f32 %v99, %v111
    %v124 = vadd.f32 %v100, %v112
    %v125 = vadd.f32 %v101, %v113
    %v126 = vadd.f32 %v102, %v114
    %v127 = vadd.f32 %v103, %v115
    %v128 = vadd.f32 %v104, %v116
    %v129 = vadd.f32 %v105, %v117
    %v130 = vadd.f32 %v106, %v118
    %v131 = vadd.f32 %v107, %v119
    %v133 = vlaneseq
    %v134 = vshrl.u32 %v133, 7
    %v135 = vsub.s32 0, %v134
    %v136 = vrot.slane %v95, %v135
    %v137 = vlaneseq
    %v138 = vshrl.u32 %v137, 7
    %v139 = vsub.s32 1, %v138
    %v140 = vrot.slane %v95, %v139
    %v141 = vlaneseq
    %v142 = vshrl.u32 %v141, 7
    %v143 = vsub.s32 2, %v142
    %v144 = vrot.slane %v95, %v143
    %v145 = vlaneseq
    %v146 = vshrl.u32 %v145, 7
    %v147 = vsub.s32 3, %v146
    %v148 = vrot.slane %v95, %v147
    %v149 = vlaneseq
    %v150 = vshrl.u32 %v149, 7
    %v151 = vsub.s32 4, %v150
    %v152 = vrot.slane %v95, %v151
    %v153 = vlaneseq
    %v154 = vshrl.u32 %v153, 7
    %v155 = vsub.s32 5, %v154
    %v156 = vrot.slane %v95, %v155
    %v163 = vmul.f32 %v136, %v120
    %v164 = vmul.f32 %v140, %v121
    %v165 = vmul.f32 %v144, %v122
    %v166 = vmul.f32 %v148, %v123
    %v167 = vmul.f32 %v152, %v124
    %v168 = vmul.f32 %v156, %v125
    %v169 = vmul.f32 %v136, %v126
    %v170 = vmul.f32 %v140, %v127
    %v171 = vmul.f32 %v144, %v128
    %v172 = vmul.f32 %v148, %v129
    %v173 = vmul.f32 %v152, %v130
    %v174 = vmul.f32 %v156, %v131
    %v175 = vadd.f32 %v59, %v163
    %v176 = vadd.f32 %v60, %v164
    %v177 = vadd.f32 %v61, %v165
    %v178 = vadd.f32 %v62, %v166
    %v179 = vadd.f32 %v63, %v167
    %v180 = vadd.f32 %v64, %v168
    %v181 = vadd.f32 %v65, %v169
    %v182 = vadd.f32 %v66, %v170
    %v183 = vadd.f32 %v67, %v171
    %v184 = vadd.f32 %v68, %v172
    %v185 = vadd.f32 %v69, %v173
    %v186 = vadd.f32 %v70, %v174
    %187 = vst [vmem:[#allocation8] sm:$0xff] %v175
    %188 = vst [vmem:[#allocation8 + $0x8] sm:$0xff] %v176
    %189 = vst [vmem:[#allocation8 + $0x10] sm:$0xff] %v177
    %190 = vst [vmem:[#allocation8 + $0x18] sm:$0xff] %v178
    %191 = vst [vmem:[#allocation8 + $0x20] sm:$0xff] %v179
    %192 = vst [vmem:[#allocation8 + $0x28] sm:$0xff] %v180
    %193 = vst [vmem:[#allocation8 + $0x30] sm:$0xff] %v181
    %194 = vst [vmem:[#allocation8 + $0x38] sm:$0xff] %v182
    %195 = vst [vmem:[#allocation8 + $0x40] sm:$0xff] %v183
    %196 = vst [vmem:[#allocation8 + $0x48] sm:$0xff] %v184
    %197 = vst [vmem:[#allocation8 + $0x50] sm:$0xff] %v185
    %198 = vst [vmem:[#allocation8 + $0x58] sm:$0xff] %v186
    // Predicated region
    $region30: #{tpu_custom_call.1} parent=1 // pred_check
      _
    $region31: #{tpu_custom_call.1} parent=1 // pred_check_branch
      %200 = sbr.rel (0) target = $region33
    $region32: #{tpu_custom_call.1} parent=1 // pred_region
      %s202 = ssub.s32 1536, 1536
      %203 = vsyncadd [#allocation4], %s202
      %s204 = sshll.u32 [#allocation8], 4
      %s205 = int_to_ptr.vmem [resolvable:$true] %s204
      %210 = dma.vmem_to_hbm [thread:$0]  %s205, 1536, %s4, [#allocation4], 768, 768, 48
    $region33: #{tpu_custom_call.1} parent=1 // pred_fallthru
      _
    // Predicated region
    $region34: #{tpu_custom_call.1} parent=1 // pred_check
      _
    $region35: #{tpu_custom_call.1} parent=1 // pred_check_branch
      %212 = sbr.rel (0) target = $region37
    $region36: #{tpu_custom_call.1} parent=1 // pred_region
      %213 = dma.done [#allocation4], 1536
    $region37: #{tpu_custom_call.1} parent=1 // pred_fallthru
      _
    %214 = vsyncpa [#allocation3], 1
    %215 = vsyncpa [#allocation6], 1
    %216 = vsyncpa [#allocation4], 1

</llo_original>
